<compile_context>
chip_gen: v7x
topology: tpu7x:2x2x1
jax: 0.10.0
libtpu: 0.0.40
codegen_flags: <defaults>
</compile_context>

<pallas_src>
import functools

import numpy as np

import jax
import jax.numpy as jnp
from jax.experimental import pallas as pl
from jax.experimental.pallas import tpu as pltpu


def _round_up(x, m):
    return ((x + m - 1) // m) * m


def maskblock_kernel(thre_ref, x_ref, w1r_ref, seg_ref, w2t_ref, b2_ref,
                     out_ref, acc_ref, *, clamp_max, c_out, inv_hw):
    """Grid = (batch_tiles, hw_tiles).  The HW axis is an 'arbitrary' reduction.

    x_ref   : (rows_tile, hw_tile) bf16/f32, rows = batch*channel packed on sublanes
    w1r_ref : (rows_tile, Hid) f32, w1r[r, :] = fc1.weight[:, r % C_in]
    seg_ref : (bt, rows_tile) f32 one-hot segment matrix (r // C_in == b)
    w2t_ref : (Hid, OUT_W) f32, fc2.weight.T duplicated into lanes [0,C) and [C,2C)
    b2_ref  : (1, OUT_W) f32, fc2.bias duplicated the same way
    out_ref : (bt, OUT_W) f32 packed slab [mask | mask_before | lasso | 0]
    acc_ref : (rows_tile, 128) f32 running partial sums over HW
    """
    hw_i = pl.program_id(1)
    n_hw = pl.num_programs(1)

    # ---- every HW step: cheap VPU accumulation (hides under the x DMA) --------
    @pl.when(hw_i == 0)
    def _():
        acc_ref[...] = jnp.zeros_like(acc_ref)

    n_chunks = x_ref.shape[1] // 128
    for c in range(n_chunks):                      # static, small unrolled loop
        acc_ref[...] += x_ref[:, c * 128:(c + 1) * 128].astype(jnp.float32)

    # ---- last HW step only: reduce + tiny FCs + single lane-dense store -------
    @pl.when(hw_i == n_hw - 1)
    def _():
        bt = out_ref.shape[0]
        out_w = out_ref.shape[1]

        # adaptive_avg_pool2d(1): per (batch, channel) mean over the TRUE H*W.
        means = jnp.sum(acc_ref[...], axis=-1, keepdims=True) * inv_hw  # (rows, 1)

        # fc1 (no bias) + ReLU -- VPU broadcast-multiply + segment (sublane) reduce.
        prod1 = means * w1r_ref[...]                                    # (rows, Hid)
        h = jnp.sum(seg_ref[...][:, :, None] * prod1[None, :, :], axis=1)  # (bt, Hid)
        h = jnp.maximum(h, 0.0)

        # fc2 (+ bias) at full lane width (same vreg count as width C_out).
        p2 = h[:, :, None] * w2t_ref[...][None, :, :]                   # (bt, Hid, OUT_W)
        y = jnp.sum(p2, axis=1) + b2_ref[...]                           # (bt, OUT_W)

        # mask_before = clamp(relu(y), max); padded lanes stay exactly 0.
        mb = jnp.minimum(jnp.maximum(y, 0.0), clamp_max)

        # Hard threshold (strict <, as in torch).
        thre = thre_ref[0]
        masked = jnp.where(mb < thre, 0.0, mb)

        lane = jax.lax.broadcasted_iota(jnp.int32, (bt, out_w), 1)
        in_first = lane < c_out
        in_second = jnp.logical_and(lane >= c_out, lane < 2 * c_out)
        is_lasso = lane == 2 * c_out

        # _lasso = mask_before.mean(dim=-1) over the true C_out channels.
        lasso = jnp.sum(jnp.where(in_first, mb, 0.0), axis=-1,
                        keepdims=True) * (1.0 / c_out)

        # TODO(synk): training-mode running-buffer update (mask_sum += mask_before.sum(0))
        # is a stateful nn.Module side effect; this implements the inference path.

        # One unmasked, lane-dense store: [ mask | mask_before | lasso | 0 pad ].
        slab = jnp.where(in_first, masked,
               jnp.where(in_second, mb,
               jnp.where(is_lasso, lasso, 0.0)))
        out_ref[...] = slab


def maskblock_prepare_params(w1, w2, b2, thre):
    """One-time layout/dtype prep.  Cache the result; do NOT redo per forward call.

    w1: fc1.weight (Hid, C_in)   w2: fc2.weight (C_out, Hid)   b2: (C_out,)   thre: (1,)
    """
    w1 = jnp.asarray(w1, jnp.float32)
    w2 = jnp.asarray(w2, jnp.float32)
    b2 = jnp.asarray(b2, jnp.float32)
    c_out, hid = w2.shape
    out_w = max(128, _round_up(2 * c_out + 1, 128))

    # fc2 weights/bias padded to OUT_W lanes and duplicated into lanes [0,C) and
    # [C,2C) so the kernel's packed slab needs no lane shifts or concats.
    w2t = w2.T                                                    # (Hid, C_out)
    w2t_pad = jnp.zeros((hid, out_w), jnp.float32)
    w2t_pad = w2t_pad.at[:, :c_out].set(w2t).at[:, c_out:2 * c_out].set(w2t)
    b2_pad = jnp.zeros((1, out_w), jnp.float32)
    b2_pad = b2_pad.at[:, :c_out].set(b2).at[:, c_out:2 * c_out].set(b2)

    return {
        "w1": w1,                                                 # (Hid, C_in)
        "w2t_pad": w2t_pad,                                       # (Hid, OUT_W)
        "b2_pad": b2_pad,                                         # (1, OUT_W)
        "b2": b2.reshape(1, -1),                                  # unpadded; static C_out carrier
        "thre": jnp.asarray(thre, jnp.float32).reshape((1,)),     # (1,) SMEM scalar
    }


def _pick_batch_tile(B, C_in, max_rows=256):
    """Batch tile BT (divisor of B).  Single tile if small; otherwise BT % 8 == 0
    (f32 output sublane rule) and BT*C_in % 16 == 0 (bf16 x sublane rule)."""
    if B * C_in <= max_rows:
        return B
    cands = [bt for bt in range(1, B)
             if B % bt == 0 and bt % 8 == 0 and (bt * C_in) % 16 == 0
             and bt * C_in <= max_rows]
    return max(cands) if cands else B


def maskblock_forward(x, params, clamp_max, *, hw_tile=None):
    """x: (B, C_in, H, W) NCHW.  Returns (mask, lasso, mask_before)."""
    B, C_in, H, W = x.shape
    HW = H * W

    w1 = params["w1"]
    hid = w1.shape[0]
    assert w1.shape[1] == C_in
    c_out = params["b2"].shape[1]
    out_w = params["w2t_pad"].shape[1]

    # Sublane-dense (B*C_in, HW) view + bf16 DMA (kernel accumulates in f32).
    # In a real model the producer should emit bf16 so this cast fuses away.
    x2 = x.reshape(B * C_in, HW)
    if x2.dtype.itemsize > 2:
        x2 = x2.astype(jnp.bfloat16)

    bt = _pick_batch_tile(B, C_in)
    rows_tile = bt * C_in
    nb = B // bt

    # HW tile: multiple of 128, sized so a double-buffered x tile stays ~1 MiB --
    # safe under v5e's 16 MiB / v6e-v7x's 32 MiB default scoped VMEM and v7x's
    # 64 MiB physical VMEM without touching vmem_limit_bytes.
    if hw_tile is None:
        budget = 1 << 20
        hw_tile = max(128, (budget // (rows_tile * x2.dtype.itemsize)) // 128 * 128)
    hw_tile = int(min(int(hw_tile), _round_up(HW, 128)))
    hw_tile = _round_up(hw_tile, 128)
    hwp = _round_up(HW, hw_tile)
    if hwp != HW:
        x2 = jnp.pad(x2, ((0, 0), (0, hwp - HW)))   # zeros: exact sum; divide by true HW
    n_hw = hwp // hw_tile

    # Tiny per-compile constants for the in-kernel segment-sum FC1 (no reshapes).
    w1_rows = jnp.tile(w1.T, (bt, 1))                               # (rows_tile, Hid)
    seg = (np.arange(rows_tile) // C_in ==
           np.arange(bt)[:, None]).astype(np.float32)               # (bt, rows_tile)
    seg = jnp.asarray(seg)

    kernel = functools.partial(
        maskblock_kernel, clamp_max=float(clamp_max), c_out=int(c_out),
        inv_hw=1.0 / float(HW))

    flops = B * C_in * HW + 2 * B * C_in * hid + 2 * B * hid * out_w + 8 * B * out_w
    bytes_accessed = (x2.size * x2.dtype.itemsize
                      + (w1_rows.size + seg.size) * 4
                      + (params["w2t_pad"].size + params["b2_pad"].size) * 4
                      + B * out_w * 4 + 4)

    slab = pl.pallas_call(
        kernel,
        out_shape=jax.ShapeDtypeStruct((B, out_w), jnp.float32),
        grid_spec=pltpu.PrefetchScalarGridSpec(
            num_scalar_prefetch=0,
            grid=(nb, n_hw),
            in_specs=[
                pl.BlockSpec(memory_space=pltpu.MemorySpace.SMEM),             # thre (1,)
                pl.BlockSpec((rows_tile, hw_tile), lambda bi, hi: (bi, hi)),    # x
                pl.BlockSpec((rows_tile, hid), lambda bi, hi: (0, 0)),          # w1_rows
                pl.BlockSpec((bt, rows_tile), lambda bi, hi: (0, 0)),           # seg
                pl.BlockSpec((hid, out_w), lambda bi, hi: (0, 0)),              # w2t_pad
                pl.BlockSpec((1, out_w), lambda bi, hi: (0, 0)),                # b2_pad
            ],
            out_specs=pl.BlockSpec((bt, out_w), lambda bi, hi: (bi, 0)),
            scratch_shapes=[pltpu.VMEM((rows_tile, 128), jnp.float32)],
        ),
        compiler_params=pltpu.CompilerParams(
            dimension_semantics=("parallel", "arbitrary")),
        cost_estimate=pl.CostEstimate(
            flops=int(flops), transcendentals=0, bytes_accessed=int(bytes_accessed)),
    )(params["thre"], x2, w1_rows, seg, params["w2t_pad"], params["b2_pad"])

    mask = slab[:, :c_out]
    mask_before = slab[:, c_out:2 * c_out]
    lasso = slab[:, 2 * c_out]
    return mask, lasso, mask_before


def kaiming_normal(key, shape):
    # nn.init.kaiming_normal_ default: fan_in mode, gain = sqrt(2)
    fan_in = shape[1]
    std = (2.0 / fan_in) ** 0.5
    return std * jax.random.normal(key, shape, dtype=jnp.float32)


if __name__ == "__main__":
    # Module hyper-parameters (args): squeeze_rate=4, clamp_max=1.0, thre_init=0.1
    in_channels = 4
    out_channels = 16
    squeeze_rate = 4
    if out_channels < 80:              # matches MaskBlock.__init__
        squeeze_rate = squeeze_rate // 2
    hidden = out_channels // squeeze_rate
    clamp_max = 1.0
    thre_init = 0.1

    B, H, W = 2, 16, 16

    key = jax.random.PRNGKey(0)
    kx, k1, k2 = jax.random.split(key, 3)

    x = jax.random.normal(kx, (B, in_channels, H, W), dtype=jnp.float32)
    w1 = kaiming_normal(k1, (hidden, in_channels))        # fc1.weight
    w2 = kaiming_normal(k2, (out_channels, hidden))       # fc2.weight
    b2 = jnp.ones((out_channels,), dtype=jnp.float32)     # fc2.bias = 1.0
    thre = jnp.full((1,), thre_init, dtype=jnp.float32)

    # Prepare (transpose / pad / cast) weights ONCE; reuse across forward calls.
    params = maskblock_prepare_params(w1, w2, b2, thre)

    # hw_tile=128 -> 2-step HW reduction grid, exercising the pipelined
    # accumulate + pl.when epilogue path (auto tile would fit HW in one step).
    fwd = jax.jit(functools.partial(maskblock_forward, clamp_max=clamp_max,
                                    hw_tile=128))

    mask, lasso, mask_before = fwd(x, params)
    jax.block_until_ready((mask, lasso, mask_before))

    # Pure-JAX reference (bf16-cast x to match the kernel's DMA dtype; all-VPU-style
    # f32 math so no MXU-precision flakiness in the comparison).
    x_bf = x.astype(jnp.bfloat16).astype(jnp.float32)
    x_avg = jnp.mean(x_bf.reshape(B, in_channels, H * W), axis=-1)
    h_ref = jnp.maximum(jnp.sum(x_avg[:, None, :] * w1[None, :, :], axis=-1), 0.0)
    y_ref = jnp.sum(h_ref[:, :, None] * w2.T[None, :, :], axis=1) + b2
    mb_ref = jnp.minimum(jnp.maximum(y_ref, 0.0), clamp_max)
    lasso_ref = jnp.mean(mb_ref, axis=-1)

    assert mask.shape == (B, out_channels)
    assert lasso.shape == (B,)
    assert mask_before.shape == (B, out_channels)
    assert jnp.allclose(mask_before, mb_ref, atol=1e-4, rtol=1e-4)
    assert jnp.allclose(lasso, lasso_ref, atol=1e-4, rtol=1e-4)
    # Threshold consistency checked against the kernel's own mask_before to avoid
    # float-boundary flakiness.
    assert jnp.allclose(mask, jnp.where(mask_before < thre[0], 0.0, mask_before))
    print("KERNEL_OK")
</pallas_src>

<mosaic_0001>
module attributes {stable_mosaic.version = 11 : i64} {
  func.func @maskblock_kernel(%arg0: i32, %arg1: i32, %arg2: memref<1xf32, #tpu.memory_space<smem>>, %arg3: memref<8x128xbf16, #tpu.memory_space<vmem>>, %arg4: memref<8x8xf32, #tpu.memory_space<vmem>>, %arg5: memref<2x8xf32, #tpu.memory_space<vmem>>, %arg6: memref<8x128xf32, #tpu.memory_space<vmem>>, %arg7: memref<1x128xf32, #tpu.memory_space<vmem>>, %arg8: memref<2x128xf32, #tpu.memory_space<vmem>>, %arg9: memref<8x128xf32, #tpu.memory_space<vmem>>) attributes {dimension_semantics = [#tpu.dimension_semantics<parallel>, #tpu.dimension_semantics<arbitrary>], iteration_bounds = array<i64: 1, 2>, scalar_prefetch = 0 : i64, scratch_operands = 1 : i64, tpu.core_type = #tpu.core_type<tc>, window_params = [{transform_indices = @transform_0, window_bounds = array<i64: 1>}, {transform_indices = @transform_1, window_bounds = array<i64: 8, 128>}, {pipeline_mode = #tpu.pipeline_mode<synchronous>, transform_indices = @transform_2, window_bounds = array<i64: 8, 8>}, {pipeline_mode = #tpu.pipeline_mode<synchronous>, transform_indices = @transform_3, window_bounds = array<i64: 2, 8>}, {pipeline_mode = #tpu.pipeline_mode<synchronous>, transform_indices = @transform_4, window_bounds = array<i64: 8, 128>}, {pipeline_mode = #tpu.pipeline_mode<synchronous>, transform_indices = @transform_5, window_bounds = array<i64: 1, 128>}, {transform_indices = @transform_6, window_bounds = array<i64: 2, 128>}]} {
    %c0_i32 = arith.constant 0 : i32
    %0 = arith.cmpi eq, %arg1, %c0_i32 : i32
    %1 = arith.extui %0 : i1 to i32
    %c0_i32_0 = arith.constant 0 : i32
    %2 = arith.cmpi ne, %1, %c0_i32_0 : i32
    scf.if %2 {
      %cst = arith.constant 0.000000e+00 : f32
      %11 = vector.broadcast %cst : f32 to vector<8x128xf32>
      %c0_7 = arith.constant 0 : index
      %c0_8 = arith.constant 0 : index
      %12 = vector.load %arg9[%c0_7, %c0_8] : memref<8x128xf32, #tpu.memory_space<vmem>>, vector<8x128xf32>
      tpu.vector_store %arg9[%c0_7, %c0_8], %11 {strides = array<i32>} : memref<8x128xf32, #tpu.memory_space<vmem>>, vector<8x128xf32>,
    } else {
    }
    %c0 = arith.constant 0 : index
    %c0_1 = arith.constant 0 : index
    %3 = vector.load %arg9[%c0, %c0_1] : memref<8x128xf32, #tpu.memory_space<vmem>>, vector<8x128xf32>
    %c0_2 = arith.constant 0 : index
    %c0_3 = arith.constant 0 : index
    %4 = vector.load %arg3[%c0_2, %c0_3] : memref<8x128xbf16, #tpu.memory_space<vmem>>, vector<8x128xbf16>
    %5 = arith.extf %4 : vector<8x128xbf16> to vector<8x128xf32>
    %6 = arith.addf %3, %5 : vector<8x128xf32>
    %c0_4 = arith.constant 0 : index
    %c0_5 = arith.constant 0 : index
    %7 = vector.load %arg9[%c0_4, %c0_5] : memref<8x128xf32, #tpu.memory_space<vmem>>, vector<8x128xf32>
    tpu.vector_store %arg9[%c0_4, %c0_5], %6 {strides = array<i32>} : memref<8x128xf32, #tpu.memory_space<vmem>>, vector<8x128xf32>,
    %c1_i32 = arith.constant 1 : i32
    %8 = arith.cmpi eq, %arg1, %c1_i32 : i32
    %9 = arith.extui %8 : i1 to i32
    %c0_i32_6 = arith.constant 0 : i32
    %10 = arith.cmpi ne, %9, %c0_i32_6 : i32
    scf.if %10 {
      %c0_7 = arith.constant 0 : index
      %c0_8 = arith.constant 0 : index
      %11 = vector.load %arg9[%c0_7, %c0_8] : memref<8x128xf32, #tpu.memory_space<vmem>>, vector<8x128xf32>
      %cst = arith.constant dense<0.000000e+00> : vector<8xf32>
      %12 = vector.multi_reduction <add>, %11, %cst [1] : vector<8x128xf32> to vector<8xf32>
      %13 = vector.shape_cast %12 : vector<8xf32> to vector<8x1xf32>
      %cst_9 = arith.constant 3.906250e-03 : f32
      %14 = vector.broadcast %cst_9 : f32 to vector<8x1xf32>
      %15 = arith.mulf %13, %14 : vector<8x1xf32>
      %c0_10 = arith.constant 0 : index
      %c0_11 = arith.constant 0 : index
      %16 = vector.load %arg4[%c0_10, %c0_11] : memref<8x8xf32, #tpu.memory_space<vmem>>, vector<8x8xf32>
      %17 = vector.broadcast %15 : vector<8x1xf32> to vector<8x8xf32>
      %18 = arith.mulf %17, %16 : vector<8x8xf32>
      %c0_12 = arith.constant 0 : index
      %c0_13 = arith.constant 0 : index
      %19 = vector.load %arg5[%c0_12, %c0_13] : memref<2x8xf32, #tpu.memory_space<vmem>>, vector<2x8xf32>
      %20 = vector.shape_cast %19 : vector<2x8xf32> to vector<2x8x1xf32>
      %21 = vector.shape_cast %18 : vector<8x8xf32> to vector<1x8x8xf32>
      %22 = vector.broadcast %20 : vector<2x8x1xf32> to vector<2x8x8xf32>
      %23 = vector.broadcast %21 : vector<1x8x8xf32> to vector<2x8x8xf32>
      %24 = arith.mulf %22, %23 : vector<2x8x8xf32>
      %cst_14 = arith.constant dense<0.000000e+00> : vector<2x8xf32>
      %25 = vector.multi_reduction <add>, %24, %cst_14 [1] : vector<2x8x8xf32> to vector<2x8xf32>
      %cst_15 = arith.constant 0.000000e+00 : f32
      %26 = vector.broadcast %cst_15 : f32 to vector<2x8xf32>
      %27 = arith.maximumf %25, %26 : vector<2x8xf32>
      %28 = vector.shape_cast %27 : vector<2x8xf32> to vector<2x8x1xf32>
      %c0_16 = arith.constant 0 : index
      %c0_17 = arith.constant 0 : index
      %29 = vector.load %arg6[%c0_16, %c0_17] : memref<8x128xf32, #tpu.memory_space<vmem>>, vector<8x128xf32>
      %30 = vector.shape_cast %29 : vector<8x128xf32> to vector<1x8x128xf32>
      %31 = vector.broadcast %28 : vector<2x8x1xf32> to vector<2x8x128xf32>
      %32 = vector.broadcast %30 : vector<1x8x128xf32> to vector<2x8x128xf32>
      %33 = arith.mulf %31, %32 : vector<2x8x128xf32>
      %cst_18 = arith.constant dense<0.000000e+00> : vector<2x128xf32>
      %34 = vector.multi_reduction <add>, %33, %cst_18 [1] : vector<2x8x128xf32> to vector<2x128xf32>
      %c0_19 = arith.constant 0 : index
      %c0_20 = arith.constant 0 : index
      %35 = vector.load %arg7[%c0_19, %c0_20] : memref<1x128xf32, #tpu.memory_space<vmem>>, vector<1x128xf32>
      %36 = vector.broadcast %35 : vector<1x128xf32> to vector<2x128xf32>
      %37 = arith.addf %34, %36 : vector<2x128xf32>
      %cst_21 = arith.constant 0.000000e+00 : f32
      %38 = vector.broadcast %cst_21 : f32 to vector<2x128xf32>
      %39 = arith.maximumf %37, %38 : vector<2x128xf32>
      %cst_22 = arith.constant 1.000000e+00 : f32
      %40 = vector.broadcast %cst_22 : f32 to vector<2x128xf32>
      %41 = arith.minimumf %39, %40 : vector<2x128xf32>
      %c0_23 = arith.constant 0 : index
      %42 = memref.load %arg2[%c0_23] : memref<1xf32, #tpu.memory_space<smem>>
      %43 = vector.broadcast %42 : f32 to vector<2x128xf32>
      %44 = arith.cmpf olt, %41, %43 : vector<2x128xf32>
      %cst_24 = arith.constant 0.000000e+00 : f32
      %45 = vector.broadcast %cst_24 : f32 to vector<2x128xf32>
      %46 = arith.select %44, %45, %41 : vector<2x128xi1>, vector<2x128xf32>
      %47 = tpu.iota {dimensions = array<i32: 1>} : vector<2x128xi32>
      %c16_i32 = arith.constant 16 : i32
      %48 = vector.broadcast %c16_i32 : i32 to vector<2x128xi32>
      %49 = arith.cmpi slt, %47, %48 : vector<2x128xi32>
      %c16_i32_25 = arith.constant 16 : i32
      %50 = vector.broadcast %c16_i32_25 : i32 to vector<2x128xi32>
      %51 = arith.cmpi sge, %47, %50 : vector<2x128xi32>
      %c32_i32 = arith.constant 32 : i32
      %52 = vector.broadcast %c32_i32 : i32 to vector<2x128xi32>
      %53 = arith.cmpi slt, %47, %52 : vector<2x128xi32>
      %54 = arith.andi %51, %53 : vector<2x128xi1>
      %c32_i32_26 = arith.constant 32 : i32
      %55 = vector.broadcast %c32_i32_26 : i32 to vector<2x128xi32>
      %56 = arith.cmpi eq, %47, %55 : vector<2x128xi32>
      %cst_27 = arith.constant 0.000000e+00 : f32
      %57 = vector.broadcast %cst_27 : f32 to vector<2x128xf32>
      %58 = arith.select %49, %41, %57 : vector<2x128xi1>, vector<2x128xf32>
      %cst_28 = arith.constant dense<0.000000e+00> : vector<2xf32>
      %59 = vector.multi_reduction <add>, %58, %cst_28 [1] : vector<2x128xf32> to vector<2xf32>
      %60 = vector.shape_cast %59 : vector<2xf32> to vector<2x1xf32>
      %cst_29 = arith.constant 6.250000e-02 : f32
      %61 = vector.broadcast %cst_29 : f32 to vector<2x1xf32>
      %62 = arith.mulf %60, %61 : vector<2x1xf32>
      %cst_30 = arith.constant 0.000000e+00 : f32
      %63 = vector.shape_cast %62 : vector<2x1xf32> to vector<2x1xf32>
      %64 = vector.broadcast %63 : vector<2x1xf32> to vector<2x128xf32>
      %65 = vector.broadcast %cst_30 : f32 to vector<2x128xf32>
      %66 = arith.select %56, %64, %65 : vector<2x128xi1>, vector<2x128xf32>
      %67 = arith.select %54, %41, %66 : vector<2x128xi1>, vector<2x128xf32>
      %68 = arith.select %49, %46, %67 : vector<2x128xi1>, vector<2x128xf32>
      %c0_31 = arith.constant 0 : index
      %c0_32 = arith.constant 0 : index
      %69 = vector.load %arg8[%c0_31, %c0_32] : memref<2x128xf32, #tpu.memory_space<vmem>>, vector<2x128xf32>
      tpu.vector_store %arg8[%c0_31, %c0_32], %68 {strides = array<i32>} : memref<2x128xf32, #tpu.memory_space<vmem>>, vector<2x128xf32>,
    } else {
    }
    return
  }
  func.func @transform_0(%arg0: i32, %arg1: i32) -> i32 {
    %c0_i32 = arith.constant 0 : i32
    %c0_i32_0 = arith.constant 0 : i32
    return %c0_i32 : i32
  }
  func.func @transform_1(%arg0: i32, %arg1: i32) -> (i32, i32) {
    %c0_i32 = arith.constant 0 : i32
    return %arg0, %arg1 : i32, i32
  }
  func.func @transform_2(%arg0: i32, %arg1: i32) -> (i32, i32) {
    %c0_i32 = arith.constant 0 : i32
    %c0_i32_0 = arith.constant 0 : i32
    %c0_i32_1 = arith.constant 0 : i32
    return %c0_i32, %c0_i32_0 : i32, i32
  }
  func.func @transform_3(%arg0: i32, %arg1: i32) -> (i32, i32) {
    %c0_i32 = arith.constant 0 : i32
    %c0_i32_0 = arith.constant 0 : i32
    %c0_i32_1 = arith.constant 0 : i32
    return %c0_i32, %c0_i32_0 : i32, i32
  }
  func.func @transform_4(%arg0: i32, %arg1: i32) -> (i32, i32) {
    %c0_i32 = arith.constant 0 : i32
    %c0_i32_0 = arith.constant 0 : i32
    %c0_i32_1 = arith.constant 0 : i32
    return %c0_i32, %c0_i32_0 : i32, i32
  }
  func.func @transform_5(%arg0: i32, %arg1: i32) -> (i32, i32) {
    %c0_i32 = arith.constant 0 : i32
    %c0_i32_0 = arith.constant 0 : i32
    %c0_i32_1 = arith.constant 0 : i32
    return %c0_i32, %c0_i32_0 : i32, i32
  }
  func.func @transform_6(%arg0: i32, %arg1: i32) -> (i32, i32) {
    %c0_i32 = arith.constant 0 : i32
    %c0_i32_0 = arith.constant 0 : i32
    return %arg0, %c0_i32 : i32, i32
  }
}

</mosaic_0001>

<llo_original>
// kernel: maskblock_forward.1
$region0: #{maskblock_forward.1}
  #allocation0 [shape = 'u32[]', space=smem, size = 0x4, offset = 0x4, fixed_abs, tag = 'smem constant byte address 0x4 - core index']
  #allocation1 [shape = 'u32[144,128]{1,0:T(1,128)}', space=vmem, size = 0x12000, scoped, tag = 'internal scratch']
  #allocation2 [shape = 'f32[8,128]{1,0:T(8,128)}', space=vmem, size = 0x1000, scoped, tag = 'scratch operand']
  #allocation3 [shape = 'f32[1]{0:T(128)S(6)}', space=smem, size = 0x200, scoped, tag = 'scoped memory for maskblock_forward.1']
  %s0 = inlined_call_operand.<no memory space> [shape: f32[1], index: 0, kind: input, shape index: {}]
  %s1 = inlined_call_operand.vmem [shape: bf16[8,256], index: 1, kind: input, shape index: {}]
  %s2 = inlined_call_operand.vmem [shape: f32[8,8], index: 2, kind: input, shape index: {}]
  %s3 = inlined_call_operand.vmem [shape: f32[2,8], index: 3, kind: input, shape index: {}]
  %s4 = inlined_call_operand.vmem [shape: f32[8,128], index: 4, kind: input, shape index: {}]
  %s5 = inlined_call_operand.vmem [shape: f32[1,128], index: 5, kind: input, shape index: {}]
  %s6 = inlined_call_operand.vmem [shape: f32[2,128], index: 6, kind: output, shape index: {}]
  %s7 = sld [smem:[#allocation0]]
  $region65: #{maskblock_forward.1} parent=0
    _
  %s9 = ssub.s32 1, %s7
  %s10 = scalar_select 0, %s9, %s7
  %11 = sst [smem:[#allocation3]] %s0
  loop: start=0, step=1, limit=4
  $region2: #{maskblock_forward.1} parent=0 // loop_pre_header
    _
  $region3: #{maskblock_forward.1} parent=0 // loop_header
    %s13 = sphi 0, %s17
    %p14 = scmp.ge.s32.totalorder %s13, 4
    %s20 = sphi 0, %s32
    %s21 = sphi 0, %s28
    %s22 = sphi 0, %s20
    %s23 = sphi 0, %s21
    %s24 = sphi 0, %s22
    %s25 = sphi 0, %s23
    %s33 = sphi 0, %s33
    %s35 = sphi 0, %s33
    %s36 = sphi 0, %s35
    %s50 = sphi 0, %s36
    %s58 = sphi 0, %s60
    %s61 = sphi 0, %s58
    %s62 = sphi 0, %s61
    %s78 = sphi 0, %s62
    %s82 = sphi 0, %s82
    %s84 = sphi 0, %s82
    %s85 = sphi 0, %s84
    %s99 = sphi 0, %s85
    %s103 = sphi 0, %s103
    %s105 = sphi 0, %s103
    %s106 = sphi 0, %s105
    %s120 = sphi 0, %s106
    %s124 = sphi 0, %s124
    %s126 = sphi 0, %s124
    %s127 = sphi 0, %s126
    %s141 = sphi 0, %s127
    %s145 = sphi 0, %s145
    %s147 = sphi 0, %s145
    %s148 = sphi 0, %s147
    %s162 = sphi 0, %s148
    %s168 = sphi 0, %s170
    %s171 = sphi 0, %s168
    %s172 = sphi 0, %s171
    %s188 = sphi 0, %s172
  $region4: #{maskblock_forward.1} parent=0 // loop_header_branch
    %16 = sbr.rel (%p14) target = $region8
  $region5: #{maskblock_forward.1} parent=0 // loop_body
    %s18 = ssub.s32 %s13, 1
    %s19 = ssub.s32 %s13, 2
    %s26 = sadd.s32 1, %s21
    %p27 = scmp.ge.s32.totalorder %s26, 2
    %s28 = scalar_select %p27, 0, %s26
    %s29 = sadd.s32 1, %s20
    %s30 = scalar_select %p27, %s29, %s20
    %p31 = scmp.ge.s32.totalorder %s30, 1
    %s32 = scalar_select %p31, 0, %s30
    %s34 = sadd.s32 %s33, 1
    %p37 = scmp.eq.s32.totalorder %s13, 1
    %p38 = scmp.ne.s32.totalorder %s33, %s35
    %p39 = scmp.eq.s32.totalorder %s13, 0
    %p40 = por %p38, %p39
    %p41 = scmp.ne.s32.totalorder %s33, %s35
    %p42 = scmp.eq.s32.totalorder %s18, 1
    %p43 = por %p41, %p42
    %p44 = scmp.ne.s32.totalorder %s35, %s36
    %p45 = scmp.eq.s32.totalorder %s18, 0
    %p46 = por %p44, %p45
    %p47 = scmp.ne.s32.totalorder %s35, %s36
    %p48 = scmp.eq.s32.totalorder %s19, 1
    %p49 = por %p47, %p48
    %p51 = scmp.ne.s32.totalorder %s36, %s50
    %p52 = scmp.eq.s32.totalorder %s19, 0
    %p53 = por %p51, %p52
    %s54 = ssub.s32 %s20, %s32
    %s55 = ssub.s32 %s21, %s28
    %s56 = sor.u32 %s54, %s55
    %p57 = scmp.eq.s32.totalorder %s56, 0
    %s59 = sadd.s32 %s58, 1
    %s60 = scalar_select %p57, %s58, %s59
    %p63 = pneg %p57
    %p64 = scmp.eq.s32.totalorder %s13, 1
    %p65 = por %p63, %p64
    %p66 = scmp.ne.s32.totalorder %s58, %s61
    %p67 = scmp.eq.s32.totalorder %s13, 0
    %p68 = por %p66, %p67
    %p69 = scmp.ne.s32.totalorder %s58, %s61
    %p70 = scmp.eq.s32.totalorder %s18, 1
    %p71 = por %p69, %p70
    %p72 = scmp.ne.s32.totalorder %s61, %s62
    %p73 = scmp.eq.s32.totalorder %s18, 0
    %p74 = por %p72, %p73
    %p75 = scmp.ne.s32.totalorder %s61, %s62
    %p76 = scmp.eq.s32.totalorder %s19, 1
    %p77 = por %p75, %p76
    %p79 = scmp.ne.s32.totalorder %s62, %s78
    %p80 = scmp.eq.s32.totalorder %s19, 0
    %p81 = por %p79, %p80
    %s83 = sadd.s32 %s82, 1
    %p86 = scmp.eq.s32.totalorder %s13, 1
    %p87 = scmp.ne.s32.totalorder %s82, %s84
    %p88 = scmp.eq.s32.totalorder %s13, 0
    %p89 = por %p87, %p88
    %p90 = scmp.ne.s32.totalorder %s82, %s84
    %p91 = scmp.eq.s32.totalorder %s18, 1
    %p92 = por %p90, %p91
    %p93 = scmp.ne.s32.totalorder %s84, %s85
    %p94 = scmp.eq.s32.totalorder %s18, 0
    %p95 = por %p93, %p94
    %p96 = scmp.ne.s32.totalorder %s84, %s85
    %p97 = scmp.eq.s32.totalorder %s19, 1
    %p98 = por %p96, %p97
    %p100 = scmp.ne.s32.totalorder %s85, %s99
    %p101 = scmp.eq.s32.totalorder %s19, 0
    %p102 = por %p100, %p101
    %s104 = sadd.s32 %s103, 1
    %p107 = scmp.eq.s32.totalorder %s13, 1
    %p108 = scmp.ne.s32.totalorder %s103, %s105
    %p109 = scmp.eq.s32.totalorder %s13, 0
    %p110 = por %p108, %p109
    %p111 = scmp.ne.s32.totalorder %s103, %s105
    %p112 = scmp.eq.s32.totalorder %s18, 1
    %p113 = por %p111, %p112
    %p114 = scmp.ne.s32.totalorder %s105, %s106
    %p115 = scmp.eq.s32.totalorder %s18, 0
    %p116 = por %p114, %p115
    %p117 = scmp.ne.s32.totalorder %s105, %s106
    %p118 = scmp.eq.s32.totalorder %s19, 1
    %p119 = por %p117, %p118
    %p121 = scmp.ne.s32.totalorder %s106, %s120
    %p122 = scmp.eq.s32.totalorder %s19, 0
    %p123 = por %p121, %p122
    %s125 = sadd.s32 %s124, 1
    %p128 = scmp.eq.s32.totalorder %s13, 1
    %p129 = scmp.ne.s32.totalorder %s124, %s126
    %p130 = scmp.eq.s32.totalorder %s13, 0
    %p131 = por %p129, %p130
    %p132 = scmp.ne.s32.totalorder %s124, %s126
    %p133 = scmp.eq.s32.totalorder %s18, 1
    %p134 = por %p132, %p133
    %p135 = scmp.ne.s32.totalorder %s126, %s127
    %p136 = scmp.eq.s32.totalorder %s18, 0
    %p137 = por %p135, %p136
    %p138 = scmp.ne.s32.totalorder %s126, %s127
    %p139 = scmp.eq.s32.totalorder %s19, 1
    %p140 = por %p138, %p139
    %p142 = scmp.ne.s32.totalorder %s127, %s141
    %p143 = scmp.eq.s32.totalorder %s19, 0
    %p144 = por %p142, %p143
    %s146 = sadd.s32 %s145, 1
    %p149 = scmp.eq.s32.totalorder %s13, 1
    %p150 = scmp.ne.s32.totalorder %s145, %s147
    %p151 = scmp.eq.s32.totalorder %s13, 0
    %p152 = por %p150, %p151
    %p153 = scmp.ne.s32.totalorder %s145, %s147
    %p154 = scmp.eq.s32.totalorder %s18, 1
    %p155 = por %p153, %p154
    %p156 = scmp.ne.s32.totalorder %s147, %s148
    %p157 = scmp.eq.s32.totalorder %s18, 0
    %p158 = por %p156, %p157
    %p159 = scmp.ne.s32.totalorder %s147, %s148
    %p160 = scmp.eq.s32.totalorder %s19, 1
    %p161 = por %p159, %p160
    %p163 = scmp.ne.s32.totalorder %s148, %s162
    %p164 = scmp.eq.s32.totalorder %s19, 0
    %p165 = por %p163, %p164
    %s166 = ssub.s32 %s20, %s32
    %p167 = scmp.eq.s32.totalorder %s166, 0
    %s169 = sadd.s32 %s168, 1
    %s170 = scalar_select %p167, %s168, %s169
    %p173 = pneg %p167
    %p174 = scmp.eq.s32.totalorder %s13, 1
    %p175 = por %p173, %p174
    %p176 = scmp.ne.s32.totalorder %s168, %s171
    %p177 = scmp.eq.s32.totalorder %s13, 0
    %p178 = por %p176, %p177
    %p179 = scmp.ne.s32.totalorder %s168, %s171
    %p180 = scmp.eq.s32.totalorder %s18, 1
    %p181 = por %p179, %p180
    %p182 = scmp.ne.s32.totalorder %s171, %s172
    %p183 = scmp.eq.s32.totalorder %s18, 0
    %p184 = por %p182, %p183
    %p185 = scmp.ne.s32.totalorder %s171, %s172
    %p186 = scmp.eq.s32.totalorder %s19, 1
    %p187 = por %p185, %p186
    %p189 = scmp.ne.s32.totalorder %s172, %s188
    %p190 = scmp.eq.s32.totalorder %s19, 0
    %p191 = por %p189, %p190
    %p192 = scmp.le.s32.totalorder 1, %s13
    %p193 = scmp.lt.s32.totalorder %s13, 3
    %p194 = pnand %p192, %p193
    %p195 = pneg %p194
    // Predicated region
    $region9: #{maskblock_forward.1} parent=5 // pred_check
      _
    $region10: #{maskblock_forward.1} parent=5 // pred_check_branch
      %197 = sbr.rel (%p194) target = $region12
    $region11: #{maskblock_forward.1} parent=5 // pred_region
      %s198 = ssub.s32 %s13, 1
      // Predicated region
      $region13: #{maskblock_forward.1} parent=11 // pred_check
        %p199 = pneg %p46
      $region14: #{maskblock_forward.1} parent=11 // pred_check_branch
        %201 = sbr.rel (%p199) target = $region16
      $region15: #{maskblock_forward.1} parent=11 // pred_region
        _
      $region16: #{maskblock_forward.1} parent=11 // pred_fallthru
        _
      // Predicated region
      $region17: #{maskblock_forward.1} parent=11 // pred_check
        %p202 = pneg %p95
      $region18: #{maskblock_forward.1} parent=11 // pred_check_branch
        %204 = sbr.rel (%p202) target = $region20
      $region19: #{maskblock_forward.1} parent=11 // pred_region
        _
      $region20: #{maskblock_forward.1} parent=11 // pred_fallthru
        _
      // Predicated region
      $region21: #{maskblock_forward.1} parent=11 // pred_check
        %p205 = pneg %p116
      $region22: #{maskblock_forward.1} parent=11 // pred_check_branch
        %207 = sbr.rel (%p205) target = $region24
      $region23: #{maskblock_forward.1} parent=11 // pred_region
        _
      $region24: #{maskblock_forward.1} parent=11 // pred_fallthru
        _
      // Predicated region
      $region25: #{maskblock_forward.1} parent=11 // pred_check
        %p208 = pneg %p137
      $region26: #{maskblock_forward.1} parent=11 // pred_check_branch
        %210 = sbr.rel (%p208) target = $region28
      $region27: #{maskblock_forward.1} parent=11 // pred_region
        _
      $region28: #{maskblock_forward.1} parent=11 // pred_fallthru
        _
      // Predicated region
      $region29: #{maskblock_forward.1} parent=11 // pred_check
        %p211 = pneg %p158
      $region30: #{maskblock_forward.1} parent=11 // pred_check_branch
        %213 = sbr.rel (%p211) target = $region32
      $region31: #{maskblock_forward.1} parent=11 // pred_region
        _
      $region32: #{maskblock_forward.1} parent=11 // pred_fallthru
        _
    $region12: #{maskblock_forward.1} parent=5 // pred_fallthru
      _
    %p214 = scmp.lt.s32.totalorder %s13, 2
    // Predicated region
    $region33: #{maskblock_forward.1} parent=5 // pred_check
      %p215 = pneg %p214
    $region34: #{maskblock_forward.1} parent=5 // pred_check_branch
      %217 = sbr.rel (%p215) target = $region36
    $region35: #{maskblock_forward.1} parent=5 // pred_region
      // Predicated region
      $region37: #{maskblock_forward.1} parent=35 // pred_check
        %p218 = pneg %p68
      $region38: #{maskblock_forward.1} parent=35 // pred_check_branch
        %220 = sbr.rel (%p218) target = $region40
      $region39: #{maskblock_forward.1} parent=35 // pred_region
        %p221 = scmp.lt.s32.totalorder %s20, 0
        %s222 = scalar_select %p221, %s20, 0
        %p223 = scmp.lt.s32.totalorder %s21, 1
        %s224 = scalar_select %p223, %s21, 1
        %s225 = smul.addr %s222, 2
        %s226 = sadd.s32 %s224, %s225
        %s227 = smul.addr %s226, 4
        %s228 = scalar_lea.vmem %s1, %s227
      $region40: #{maskblock_forward.1} parent=35 // pred_fallthru
        _
    $region36: #{maskblock_forward.1} parent=5 // pred_fallthru
      _
    %p229 = scmp.le.s32.totalorder 1, %s13
    %p230 = scmp.lt.s32.totalorder %s13, 3
    %p231 = pnand %p229, %p230
    %p232 = pneg %p231
    // Predicated region
    $region41: #{maskblock_forward.1} parent=5 // pred_check
      _
    $region42: #{maskblock_forward.1} parent=5 // pred_check_branch
      %234 = sbr.rel (%p231) target = $region44
    $region43: #{maskblock_forward.1} parent=5 // pred_region
      %s235 = ssub.s32 %s13, 1
      %p236 = pneg %p46
      %p237 = pneg %p43
      %p238 = scmp.lt.s32.totalorder %s22, 0
      %s239 = scalar_select %p238, %s22, 0
      %p240 = scmp.lt.s32.totalorder %s23, 1
      %s241 = scalar_select %p240, %s23, 1
      %s242 = smul.addr %s239, 2
      %s243 = sadd.s32 %s241, %s242
      %s244 = smul.addr %s243, 4
      %s245 = scalar_lea.vmem %s1, %s244
      %p246 = pneg %p74
      %p247 = pneg %p71
      %p248 = pneg %p95
      %p249 = pneg %p92
      %p250 = pneg %p116
      %p251 = pneg %p113
      %p252 = pneg %p137
      %p253 = pneg %p134
      %p254 = pneg %p158
      %p255 = pneg %p155
      %p256 = pneg %p184
      %p257 = pneg %p181
      %p258 = scmp.lt.s32.totalorder %s22, 0
      %s259 = scalar_select %p258, %s22, 0
      %s260 = smul.addr %s259, 2
      %s261 = scalar_lea.vmem %s6, %s260
      %p262 = scmp.lt.s32.totalorder %s22, 0
      %s263 = scalar_select %p262, %s22, 0
      %p264 = scmp.lt.s32.totalorder %s23, 1
      %s265 = scalar_select %p264, %s23, 1
      %s266 = smul.addr %s263, 2
      %s267 = sadd.s32 %s265, %s266
      %s268 = smul.addr %s267, 4
      %s269 = scalar_lea.vmem %s1, %s268
      %p270 = scmp.lt.s32.totalorder %s22, 0
      %s271 = scalar_select %p270, %s22, 0
      %s272 = smul.addr %s271, 2
      %s273 = scalar_lea.vmem %s6, %s272
      %p274 = scmp.eq.s32.totalorder %s23, 0
      // Predicated region
      $region45: #{maskblock_forward.1} parent=43 // pred_check
        %p275 = pneg %p274
      $region46: #{maskblock_forward.1} parent=43 // pred_check_branch
        %277 = sbr.rel (%p275) target = $region48
      $region47: #{maskblock_forward.1} parent=43 // pred_region
        %278 = vst [vmem:[#allocation2] sm:$0xff] 0.0
      $region48: #{maskblock_forward.1} parent=43 // pred_fallthru
        _
      %v279 = vld [vmem:[#allocation2] sm:$0xff]
      %v280 = vld [vmem:[%s269] sm:$0xf]
      %v281 = vunpack.c.l.bf16 %v280
      %v282 = vadd.f32 %v279, %v281
      %283 = vst [vmem:[#allocation2] sm:$0xff] %v282
      %p284 = scmp.eq.s32.totalorder %s23, 1
      // Predicated region
      $region49: #{maskblock_forward.1} parent=43 // pred_check
        %p285 = pneg %p284
      $region50: #{maskblock_forward.1} parent=43 // pred_check_branch
        %287 = sbr.rel (%p285) target = $region52
      $region51: #{maskblock_forward.1} parent=43 // pred_region
        %v288 = vld [vmem:[#allocation2] sm:$0xff]
        %289 = vadd.xlane.f32.xlu0 %v288
        %v290 = vpop.xlane.xlu0 %289
        %v291 = vmul.f32 %v290, 0.00390625
        %v292 = vld [vmem:[%s2] sm:$0xff]
        %v293 = vmul.f32 %v291, %v292
        %v294 = vld [vmem:[%s3] sm:$0x3]
        %v295 = vlaneseq
        %v296 = vshrl.u32 %v295, 7
        %v297 = vsub.s32 0, %v296
        %v298 = vrot.slane %v294, %v297
        %300 = vbcast.lane.b32.xlu0 %v298, 256
        %v301 = vpop.permute.xlu0 %300
        %v302 = vlaneseq
        %v303 = vshrl.u32 %v302, 7
        %v304 = vsub.s32 1, %v303
        %v305 = vrot.slane %v294, %v304
        %307 = vbcast.lane.b32.xlu0 %v305, 256
        %v308 = vpop.permute.xlu0 %307
        %v309 = vmul.f32 %v301, %v293
        %v310 = vmul.f32 %v308, %v293
        %vm311 = vcmask 64512
        %v312 = vsel %vm311, %v309, 0.0
        %v313 = vrot.slane %v312, 4
        %v314 = vadd.f32 %v312, %v313
        %v315 = vrot.slane %v314, 2
        %v316 = vadd.f32 %v314, %v315
        %v317 = vrot.slane %v316, 1
        %v318 = vadd.f32 %v316, %v317
        %v319 = vsel %vm311, %v310, 0.0
        %v320 = vrot.slane %v319, 4
        %v321 = vadd.f32 %v319, %v320
        %v322 = vrot.slane %v321, 2
        %v323 = vadd.f32 %v321, %v322
        %v324 = vrot.slane %v323, 1
        %v325 = vadd.f32 %v323, %v324
        %v326 = vmax.f32 %v318, 0.0
        %v327 = vmax.f32 %v325, 0.0
        %329 = vbcast.lane.b32.xlu0 %v326, 256
        %v330 = vpop.permute.xlu0 %329
        %332 = vbcast.lane.b32.xlu0 %v327, 256
        %v333 = vpop.permute.xlu0 %332
        %v334 = vld [vmem:[%s4] sm:$0xff]
        %v335 = vmul.f32 %v330, %v334
        %v336 = vmul.f32 %v333, %v334
        %v337 = vrot.slane %v335, 4
        %v338 = vadd.f32 %v335, %v337
        %v339 = vrot.slane %v338, 2
        %v340 = vadd.f32 %v338, %v339
        %v341 = vrot.slane %v340, 1
        %v342 = vadd.f32 %v340, %v341
        %v343 = vrot.slane %v336, 4
        %v344 = vadd.f32 %v336, %v343
        %v345 = vrot.slane %v344, 2
        %v346 = vadd.f32 %v344, %v345
        %v347 = vrot.slane %v346, 1
        %v348 = vadd.f32 %v346, %v347
        %v349 = vld [vmem:[%s5] sm:$0x1]
        %v351 = vlaneseq
        %v352 = vshrl.u32 %v351, 7
        %v353 = vsub.s32 0, %v352
        %v354 = vrot.slane %v349, %v353
        %v356 = vadd.f32 %v342, %v354
        %v357 = vadd.f32 %v348, %v354
        %v358 = vmax.f32 %v356, 0.0
        %v359 = vmax.f32 %v357, 0.0
        %v360 = vmin.f32 %v358, 1.0
        %v361 = vmin.f32 %v359, 1.0
        %s362 = sld [smem:[#allocation3]]
        %v363 = vstv %s362
        %vm364 = vcmp.lt.f32.partialorder %v360, %v363
        %vm365 = vcmp.lt.f32.partialorder %v361, %v363
        %v366 = vsel %vm364, 0.0, %v360
        %v367 = vsel %vm365, 0.0, %v361
        %v368 = vlaneseq
        %v369 = vand.u32 %v368, 127
        %vm370 = vcmp.lt.s32.totalorder %v369, 16
        %vm371 = vcmp.ge.s32.totalorder %v369, 16
        %vm372 = vcmp.lt.s32.totalorder %v369, 32
        %vm373 = vmand %vm371, %vm372
        %vm374 = vcmp.eq.s32.totalorder %v369, 32
        %v377 = vrot.slane %v361, 7
        %vm378 = vcmask 1041409
        %v379 = vsel %vm378, %v377, %v360
        %v381 = vsel %vm370, %v379, 0.0
        %vm382 = vcmask 1041408
        %v383 = vsel %vm382, %v381, 0.0
        %384 = vadd.xlane.f32.xlu0 %v383
        %v385 = vpop.xlane.xlu0 %384
        %v386 = vmul.f32 %v385, 0.0625
        %v387 = vsel %vm374, %v386, 0.0
        %v388 = vsel %vm373, %v379, %v387
        %v391 = vrot.slane %v367, 7
        %v392 = vsel %vm378, %v391, %v366
        %v394 = vsel %vm370, %v392, %v388
        %395 = vst [vmem:[%s273] sm:$0x3] %v394
      $region52: #{maskblock_forward.1} parent=43 // pred_fallthru
        _
      %p396 = scmp.lt.s32.totalorder %s22, 0
      %s397 = scalar_select %p396, %s22, 0
      %s398 = smul.addr %s397, 2
      %s399 = scalar_lea.vmem %s6, %s398
      // Predicated region
      $region53: #{maskblock_forward.1} parent=43 // pred_check
        %p400 = pneg %p181
      $region54: #{maskblock_forward.1} parent=43 // pred_check_branch
        %402 = sbr.rel (%p400) target = $region56
      $region55: #{maskblock_forward.1} parent=43 // pred_region
        _
      $region56: #{maskblock_forward.1} parent=43 // pred_fallthru
        _
      // Predicated region
      $region57: #{maskblock_forward.1} parent=43 // pred_check
        %p403 = pneg %p181
      $region58: #{maskblock_forward.1} parent=43 // pred_check_branch
        %405 = sbr.rel (%p403) target = $region60
      $region59: #{maskblock_forward.1} parent=43 // pred_region
        %p406 = scmp.lt.s32.totalorder %s22, 0
        %s407 = scalar_select %p406, %s22, 0
        %s408 = smul.addr %s407, 2
        %s409 = scalar_lea.vmem %s6, %s408
      $region60: #{maskblock_forward.1} parent=43 // pred_fallthru
        _
    $region44: #{maskblock_forward.1} parent=5 // pred_fallthru
      _
    %p410 = scmp.le.s32.totalorder 2, %s13
    // Predicated region
    $region61: #{maskblock_forward.1} parent=5 // pred_check
      %p411 = pneg %p410
    $region62: #{maskblock_forward.1} parent=5 // pred_check_branch
      %413 = sbr.rel (%p411) target = $region64
    $region63: #{maskblock_forward.1} parent=5 // pred_region
      %s414 = ssub.s32 %s13, 2
    $region64: #{maskblock_forward.1} parent=5 // pred_fallthru
      _
  $region6: #{maskblock_forward.1} parent=0 // loop_footer
    %s17 = sadd.s32 1, %s13
  $region7: #{maskblock_forward.1} parent=0 // loop_footer_branch
    %12 = sbr.rel target = $region3
  $region8: #{maskblock_forward.1} parent=0 // loop_exit
    _

</llo_original>
